<compile_context>
chip_gen: v5e
topology: v5e:2x2
jax: 0.10.0
libtpu: 0.0.40
codegen_flags: <defaults>
</compile_context>

<pallas_src>
import jax
import jax.numpy as jnp
import numpy as np
from jax import lax
from jax.experimental import pallas as pl
from jax.experimental.pallas import tpu as pltpu

# Fixed weights from the module's __init__ (after the leading minus sign):
#   Gx = [[-1,0,1],[-2,0,2],[-1,0,1]]   Gy = [[-1,-2,-1],[0,0,0],[1,2,1]]
_GX_NP = np.array([[-1.0, 0.0, 1.0],
                   [-2.0, 0.0, 2.0],
                   [-1.0, 0.0, 1.0]], dtype=np.float32)
_GY_NP = np.array([[-1.0, -2.0, -1.0],
                   [ 0.0,  0.0,  0.0],
                   [ 1.0,  2.0,  1.0]], dtype=np.float32)

_ROW_ALIGN = {4: 8, 2: 16, 1: 32}   # sublane alignment per dtype itemsize


# --------------------------------------------------------------------------
# In-kernel helpers
# --------------------------------------------------------------------------
def _lane_neighbors(x):
    """(xl, xr) with xl[:, c] = x[:, c-1], xr[:, c] = x[:, c+1] and the
    reflect boundary (col -1 -> col 1, col W -> col W-2).  2-D input only."""
    W = x.shape[1]
    if W % 128 == 0:
        # Lane rotations run on the XLU (otherwise idle here); the wrapped
        # border lane is fixed with the opposite rotation, which happens to
        # hold exactly the reflect value.
        left = pltpu.roll(x, 1, axis=1)        # [:, c] <- x[:, c-1], wraps at c=0
        right = pltpu.roll(x, W - 1, axis=1)   # [:, c] <- x[:, c+1], wraps at c=W-1
        lane = lax.broadcasted_iota(jnp.int32, x.shape, 1)
        xl = jnp.where(lane == 0, right, left)       # col -1 -> col 1
        xr = jnp.where(lane == W - 1, left, right)   # col W  -> col W-2
        return xl, xr
    # Ragged-W fallback (relayout copies, but only used for small widths).
    xl = jnp.concatenate([x[:, 1:2], x[:, :W - 1]], axis=1)
    xr = jnp.concatenate([x[:, 1:], x[:, W - 2:W - 1]], axis=1)
    return xl, xr


def _h_passes(x):
    """Horizontal [-1,0,1] and [1,2,1] passes of the separable Sobel."""
    xl, xr = _lane_neighbors(x)
    return xr - xl, xl + 2.0 * x + xr


def _sobel_core_padded(xp, o_ref):
    """Proven slice+concat core for a row-padded tile (ragged-W / tiny path).

    xp: (out_rows + 2, W) f32, rows reflect-padded by 1 (cols handled inside).
    """
    R = xp.shape[0]
    out_rows = R - 2
    hdiff, hsmooth = _h_passes(xp)
    gx = hdiff[:out_rows] + 2.0 * hdiff[1:out_rows + 1] + hdiff[2:out_rows + 2]
    gy = hsmooth[2:out_rows + 2] - hsmooth[:out_rows]
    o_ref[0, 0] = gx.astype(o_ref.dtype)
    o_ref[0, 1] = gy.astype(o_ref.dtype)


# --------------------------------------------------------------------------
# Kernels
# --------------------------------------------------------------------------
def _sobel_whole_kernel(x_ref, o_ref):
    """One whole (tiny) image per grid step; reflect rows in-kernel."""
    H = x_ref.shape[1]
    x = x_ref[0].astype(jnp.float32)                                   # (H, W)
    xp = jnp.concatenate([x[1:2, :], x, x[H - 2:H - 1, :]], axis=0)    # (H+2, W)
    _sobel_core_padded(xp, o_ref)


def _sobel_tiled_kernel(top_ref, x_ref, bot_ref, o_ref):
    """Row-tiled path: main tile + 1-row halos from adjacent sublane groups."""
    t = pl.program_id(1)
    nt = pl.num_programs(1)
    th = x_ref.shape[1]
    W = x_ref.shape[2]
    grp = top_ref.shape[1]                       # halo sublane-group height

    x = x_ref[0].astype(jnp.float32)             # (th, W)

    # 1-row halos: neighbouring image rows, or the in-tile reflected row at
    # the image border (row -1 -> row 1, row H -> row H-2).
    top = jnp.where(t == 0, x[1:2, :],
                    top_ref[0, grp - 1:grp, :].astype(jnp.float32))
    bot = jnp.where(t == nt - 1, x[th - 2:th - 1, :],
                    bot_ref[0, 0:1, :].astype(jnp.float32))

    if W % 128 == 0:
        # Optimised core: every shift is an XLU roll; no tile-sized relayouts.
        hdiff, hsmooth = _h_passes(x)            # (th, W)
        hd_top, hs_top = _h_passes(top)          # (1, W)
        hd_bot, hs_bot = _h_passes(bot)          # (1, W)

        row = lax.broadcasted_iota(jnp.int32, (th, W), 0)
        first = row == 0
        last = row == th - 1
        # Sublane rotations wrap; fix the wrapped boundary row with the halo.
        hd_up = jnp.where(first, hd_top, pltpu.roll(hdiff, 1, axis=0))
        hd_dn = jnp.where(last, hd_bot, pltpu.roll(hdiff, th - 1, axis=0))
        hs_up = jnp.where(first, hs_top, pltpu.roll(hsmooth, 1, axis=0))
        hs_dn = jnp.where(last, hs_bot, pltpu.roll(hsmooth, th - 1, axis=0))

        gx = hd_up + 2.0 * hdiff + hd_dn
        gy = hs_dn - hs_up
        o_ref[0, 0] = gx.astype(o_ref.dtype)
        o_ref[0, 1] = gy.astype(o_ref.dtype)
    else:
        # Ragged-W fallback: old, verified slice+concat core.
        xp = jnp.concatenate([top, x, bot], axis=0)      # (th + 2, W)
        _sobel_core_padded(xp, o_ref)


# --------------------------------------------------------------------------
# Wrapper
# --------------------------------------------------------------------------
def _row_align_for(dtype):
    return _ROW_ALIGN.get(jnp.dtype(dtype).itemsize, 8)


def _vmem_budget_bytes():
    """VMEM the kernel may plan for: capacity minus headroom, capped at 100 MiB.

    ~100 MiB on v5e/v6e (128 MiB VMEM), 48 MiB on v7x (64 MiB VMEM).
    """
    try:
        cap = int(pltpu.get_tpu_info().vmem_capacity_bytes)
    except Exception:
        cap = 64 * 1024 * 1024                     # conservative (v7x) default
    return int(min(cap - 16 * 1024 * 1024, 100 * 1024 * 1024))


def _pick_tile_h(H, W, row_align, budget_bytes, n_batch):
    """Largest multiple-of-row_align divisor of H that fits the VMEM budget.

    Budget model per tile row (f32): 2x double-buffered input block +
    4x output (2 channels x 2 buffers) + ~6 in-kernel temporaries
    ~= 12 * W * 4 bytes per row.
    """
    per_row = 12 * W * 4
    target = min(1024, max(row_align, budget_bytes // per_row))
    if n_batch < 2 and H >= 2 * row_align:
        # Keep >= 2 grid steps so both v7x TensorCores get work at N == 1.
        target = min(target, H // 2)
    target = max(row_align, target - target % row_align)
    best = row_align
    th = row_align
    while th <= min(target, H):
        if H % th == 0:
            best = th
        th += row_align
    return best


def sobel(img, *, out_dtype=None, row_tile=None):
    """img: (N, 1, H, W) -> (N, 2, H, W) Sobel responses (Gx, Gy).

    out_dtype: output dtype (default: img.dtype).  bf16 output keeps f32
        accumulation in-kernel and roughly halves output HBM traffic.
    row_tile:  override the automatically chosen row tile (must divide H,
        possibly after row padding, and be a multiple of the sublane align).
    For best performance use W % 128 == 0 (lane-dense unmasked stores + the
    XLU roll path); other widths work but use masked stores / the concat core.
    """
    N, C, H, W = img.shape
    assert C == 1, "Sobel module expects a single input channel"
    assert H >= 2 and W >= 2, "reflect padding requires H >= 2 and W >= 2"
    out_dtype = img.dtype if out_dtype is None else jnp.dtype(out_dtype)
    row_align = max(_row_align_for(img.dtype), _row_align_for(out_dtype))
    budget = _vmem_budget_bytes()

    x2d = img[:, 0]                                  # (N, H, W) — no HBM copy

    Hp = H
    if H % row_align != 0:
        pad = row_align - H % row_align
        if pad <= H - 1:
            # Appending `pad` reflected rows leaves output rows [0, H)
            # bit-identical (padded row H equals the reflected row H-2 the
            # boundary handling would otherwise use), so tile then slice.
            x2d = jnp.pad(x2d, ((0, 0), (0, pad), (0, 0)), mode="reflect")
            Hp = H + pad
        else:
            # Tiny image (H < row_align): single block per image is safe.
            return pl.pallas_call(
                _sobel_whole_kernel,
                out_shape=jax.ShapeDtypeStruct((N, 2, H, W), out_dtype),
                grid=(N,),
                in_specs=[pl.BlockSpec((1, H, W), lambda n: (n, 0, 0))],
                out_specs=pl.BlockSpec((1, 2, H, W), lambda n: (n, 0, 0, 0)),
                compiler_params=pltpu.CompilerParams(
                    dimension_semantics=("parallel",),
                    vmem_limit_bytes=budget),
            )(x2d)

    if row_tile is not None:
        tile_h = int(row_tile)
        assert Hp % tile_h == 0 and tile_h % row_align == 0, (
            f"row_tile={tile_h} must divide H(+pad)={Hp} and be a multiple "
            f"of {row_align}")
    else:
        tile_h = _pick_tile_h(Hp, W, row_align, budget, N)

    T = Hp // tile_h                 # row tiles per image
    B = tile_h // row_align          # sublane groups per tile
    n_groups = Hp // row_align       # sublane groups per image

    main_spec = pl.BlockSpec((1, tile_h, W), lambda n, t: (n, t, 0))
    # Halos: the sublane group holding image row t*tile_h - 1 / (t+1)*tile_h,
    # clamped at the image border (the clamped fetch is unused there: the
    # kernel substitutes the in-tile reflected row instead).
    top_spec = pl.BlockSpec(
        (1, row_align, W), lambda n, t: (n, jnp.maximum(t * B - 1, 0), 0))
    bot_spec = pl.BlockSpec(
        (1, row_align, W),
        lambda n, t: (n, jnp.minimum((t + 1) * B, n_groups - 1), 0))
    out_spec = pl.BlockSpec((1, 2, tile_h, W), lambda n, t: (n, 0, t, 0))

    out = pl.pallas_call(
        _sobel_tiled_kernel,
        out_shape=jax.ShapeDtypeStruct((N, 2, Hp, W), out_dtype),
        grid=(N, T),
        in_specs=[top_spec, main_spec, bot_spec],
        out_specs=out_spec,
        compiler_params=pltpu.CompilerParams(
            dimension_semantics=("parallel", "parallel"),
            vmem_limit_bytes=budget),
    )(x2d, x2d, x2d)

    return out[:, :, :H, :] if Hp != H else out


# --------------------------------------------------------------------------
# Reference + self-test
# --------------------------------------------------------------------------
def _sobel_reference(img_np):
    """Vectorized NumPy reference reproducing the PyTorch forward pass."""
    x = img_np[:, 0].astype(np.float32)                       # (N, H, W)
    p = np.pad(x, ((0, 0), (1, 1), (1, 1)), mode="reflect")   # (N, H+2, W+2)
    H, W = x.shape[1], x.shape[2]
    gx = np.zeros_like(x)
    gy = np.zeros_like(x)
    for di in range(3):
        for dj in range(3):
            win = p[:, di:di + H, dj:dj + W]
            gx += _GX_NP[di, dj] * win
            gy += _GY_NP[di, dj] * win
    return np.stack([gx, gy], axis=1)


if __name__ == "__main__":
    key = jax.random.PRNGKey(0)
    k1, k2, k3, k4 = jax.random.split(key, 4)

    # 1) Small NCHW input (batch=2, 1 channel, 16x16): ragged-W concat path.
    x_small = jax.random.normal(k1, (2, 1, 16, 16), dtype=jnp.float32)
    out_small = jax.block_until_ready(sobel(x_small))
    np.testing.assert_allclose(np.asarray(out_small),
                               _sobel_reference(np.asarray(x_small)),
                               rtol=1e-5, atol=1e-5)

    # 2) Lane-dense W with forced small row tile: roll-based core + halos.
    x_tall = jax.random.normal(k2, (1, 1, 48, 128), dtype=jnp.float32)
    out_tall = jax.block_until_ready(sobel(x_tall, row_tile=16))
    np.testing.assert_allclose(np.asarray(out_tall),
                               _sobel_reference(np.asarray(x_tall)),
                               rtol=1e-5, atol=1e-5)

    # 3) Same image with bf16 output (f32 accumulation in-kernel).
    out_bf16 = jax.block_until_ready(
        sobel(x_tall, row_tile=16, out_dtype=jnp.bfloat16))
    np.testing.assert_allclose(np.asarray(out_bf16.astype(jnp.float32)),
                               _sobel_reference(np.asarray(x_tall)),
                               rtol=2e-2, atol=2e-2)

    # 4) Automatic tile selection (N == 1 -> at least 2 parallel grid steps).
    x_auto = jax.random.normal(k3, (1, 1, 64, 256), dtype=jnp.float32)
    out_auto = jax.block_until_ready(sobel(x_auto))
    np.testing.assert_allclose(np.asarray(out_auto),
                               _sobel_reference(np.asarray(x_auto)),
                               rtol=1e-5, atol=1e-5)

    # 5) H not divisible by 8: wrapper reflect-pads rows, tiles, then slices.
    x_odd = jax.random.normal(k4, (1, 1, 20, 128), dtype=jnp.float32)
    out_odd = jax.block_until_ready(sobel(x_odd))
    np.testing.assert_allclose(np.asarray(out_odd),
                               _sobel_reference(np.asarray(x_odd)),
                               rtol=1e-5, atol=1e-5)

    print("KERNEL_OK")
</pallas_src>

<mosaic_0001>
module attributes {stable_mosaic.version = 11 : i64} {
  func.func @_sobel_tiled_kernel(%arg0: i32, %arg1: i32, %arg2: memref<1x8x16xf32, #tpu.memory_space<vmem>>, %arg3: memref<1x16x16xf32, #tpu.memory_space<vmem>>, %arg4: memref<1x8x16xf32, #tpu.memory_space<vmem>>, %arg5: memref<1x2x16x16xf32, #tpu.memory_space<vmem>>) attributes {dimension_semantics = [#tpu.dimension_semantics<parallel>, #tpu.dimension_semantics<parallel>], iteration_bounds = array<i64: 2, 1>, scalar_prefetch = 0 : i64, scratch_operands = 0 : i64, tpu.core_type = #tpu.core_type<tc>, window_params = [{transform_indices = @transform_0, window_bounds = array<i64: 1, 8, 16>}, {transform_indices = @transform_1, window_bounds = array<i64: 1, 16, 16>}, {transform_indices = @transform_2, window_bounds = array<i64: 1, 8, 16>}, {transform_indices = @transform_3, window_bounds = array<i64: 1, 2, 16, 16>}]} {
    %c0 = arith.constant 0 : index
    %c0_0 = arith.constant 0 : index
    %c0_1 = arith.constant 0 : index
    %0 = vector.load %arg3[%c0, %c0_0, %c0_1] : memref<1x16x16xf32, #tpu.memory_space<vmem>>, vector<1x16x16xf32>
    %1 = vector.shape_cast %0 : vector<1x16x16xf32> to vector<16x16xf32>
    %c0_i32 = arith.constant 0 : i32
    %2 = arith.cmpi eq, %arg1, %c0_i32 : i32
    %3 = vector.extract_strided_slice %1 {offsets = [1, 0], sizes = [1, 16], strides = [1, 1]} : vector<16x16xf32> to vector<1x16xf32>
    %c0_2 = arith.constant 0 : index
    %c7 = arith.constant 7 : index
    %c0_3 = arith.constant 0 : index
    %4 = vector.load %arg2[%c0_2, %c7, %c0_3] : memref<1x8x16xf32, #tpu.memory_space<vmem>>, vector<1x1x16xf32>
    %5 = vector.shape_cast %4 : vector<1x1x16xf32> to vector<1x16xf32>
    %6 = arith.select %2, %3, %5 : vector<1x16xf32>
    %c0_i32_4 = arith.constant 0 : i32
    %7 = arith.cmpi eq, %arg1, %c0_i32_4 : i32
    %8 = vector.extract_strided_slice %1 {offsets = [14, 0], sizes = [1, 16], strides = [1, 1]} : vector<16x16xf32> to vector<1x16xf32>
    %c0_5 = arith.constant 0 : index
    %c0_6 = arith.constant 0 : index
    %c0_7 = arith.constant 0 : index
    %9 = vector.load %arg4[%c0_5, %c0_6, %c0_7] : memref<1x8x16xf32, #tpu.memory_space<vmem>>, vector<1x1x16xf32>
    %10 = vector.shape_cast %9 : vector<1x1x16xf32> to vector<1x16xf32>
    %11 = arith.select %7, %8, %10 : vector<1x16xf32>
    %12 = tpu.concatenate %6, %1, %11 in 0 : vector<1x16xf32>, vector<16x16xf32>, vector<1x16xf32> -> vector<18x16xf32>
    %13 = vector.extract_strided_slice %12 {offsets = [0, 1], sizes = [18, 1], strides = [1, 1]} : vector<18x16xf32> to vector<18x1xf32>
    %14 = vector.extract_strided_slice %12 {offsets = [0, 0], sizes = [18, 15], strides = [1, 1]} : vector<18x16xf32> to vector<18x15xf32>
    %15 = tpu.concatenate %13, %14 in 1 : vector<18x1xf32>, vector<18x15xf32> -> vector<18x16xf32>
    %16 = vector.extract_strided_slice %12 {offsets = [0, 1], sizes = [18, 15], strides = [1, 1]} : vector<18x16xf32> to vector<18x15xf32>
    %17 = vector.extract_strided_slice %12 {offsets = [0, 14], sizes = [18, 1], strides = [1, 1]} : vector<18x16xf32> to vector<18x1xf32>
    %18 = tpu.concatenate %16, %17 in 1 : vector<18x15xf32>, vector<18x1xf32> -> vector<18x16xf32>
    %19 = arith.subf %18, %15 : vector<18x16xf32>
    %cst = arith.constant 2.000000e+00 : f32
    %20 = vector.broadcast %cst : f32 to vector<18x16xf32>
    %21 = arith.mulf %20, %12 : vector<18x16xf32>
    %22 = arith.addf %15, %21 : vector<18x16xf32>
    %23 = arith.addf %22, %18 : vector<18x16xf32>
    %24 = vector.extract_strided_slice %19 {offsets = [0, 0], sizes = [16, 16], strides = [1, 1]} : vector<18x16xf32> to vector<16x16xf32>
    %25 = vector.extract_strided_slice %19 {offsets = [1, 0], sizes = [16, 16], strides = [1, 1]} : vector<18x16xf32> to vector<16x16xf32>
    %cst_8 = arith.constant 2.000000e+00 : f32
    %26 = vector.broadcast %cst_8 : f32 to vector<16x16xf32>
    %27 = arith.mulf %26, %25 : vector<16x16xf32>
    %28 = arith.addf %24, %27 : vector<16x16xf32>
    %29 = vector.extract_strided_slice %19 {offsets = [2, 0], sizes = [16, 16], strides = [1, 1]} : vector<18x16xf32> to vector<16x16xf32>
    %30 = arith.addf %28, %29 : vector<16x16xf32>
    %31 = vector.extract_strided_slice %23 {offsets = [2, 0], sizes = [16, 16], strides = [1, 1]} : vector<18x16xf32> to vector<16x16xf32>
    %32 = vector.extract_strided_slice %23 {offsets = [0, 0], sizes = [16, 16], strides = [1, 1]} : vector<18x16xf32> to vector<16x16xf32>
    %33 = arith.subf %31, %32 : vector<16x16xf32>
    %c0_9 = arith.constant 0 : index
    %c0_10 = arith.constant 0 : index
    %c0_11 = arith.constant 0 : index
    %c0_12 = arith.constant 0 : index
    %34 = vector.load %arg5[%c0_9, %c0_10, %c0_11, %c0_12] : memref<1x2x16x16xf32, #tpu.memory_space<vmem>>, vector<1x1x16x16xf32>
    %35 = vector.shape_cast %34 : vector<1x1x16x16xf32> to vector<16x16xf32>
    %36 = vector.shape_cast %30 : vector<16x16xf32> to vector<1x1x16x16xf32>
    tpu.vector_store %arg5[%c0_9, %c0_10, %c0_11, %c0_12], %36 {strides = array<i32>} : memref<1x2x16x16xf32, #tpu.memory_space<vmem>>, vector<1x1x16x16xf32>,
    %c0_13 = arith.constant 0 : index
    %c1 = arith.constant 1 : index
    %c0_14 = arith.constant 0 : index
    %c0_15 = arith.constant 0 : index
    %37 = vector.load %arg5[%c0_13, %c1, %c0_14, %c0_15] : memref<1x2x16x16xf32, #tpu.memory_space<vmem>>, vector<1x1x16x16xf32>
    %38 = vector.shape_cast %37 : vector<1x1x16x16xf32> to vector<16x16xf32>
    %39 = vector.shape_cast %33 : vector<16x16xf32> to vector<1x1x16x16xf32>
    tpu.vector_store %arg5[%c0_13, %c1, %c0_14, %c0_15], %39 {strides = array<i32>} : memref<1x2x16x16xf32, #tpu.memory_space<vmem>>, vector<1x1x16x16xf32>,
    return
  }
  func.func @transform_0(%arg0: i32, %arg1: i32) -> (i32, i32, i32) {
    %c2_i32 = arith.constant 2 : i32
    %0 = arith.muli %arg1, %c2_i32 : i32
    %c1_i32 = arith.constant 1 : i32
    %1 = arith.subi %0, %c1_i32 : i32
    %c0_i32 = arith.constant 0 : i32
    %2 = arith.maxsi %1, %c0_i32 : i32
    %c0_i32_0 = arith.constant 0 : i32
    %c0_i32_1 = arith.constant 0 : i32
    return %arg0, %2, %c0_i32_0 : i32, i32, i32
  }
  func.func @transform_1(%arg0: i32, %arg1: i32) -> (i32, i32, i32) {
    %c0_i32 = arith.constant 0 : i32
    %c0_i32_0 = arith.constant 0 : i32
    return %arg0, %arg1, %c0_i32 : i32, i32, i32
  }
  func.func @transform_2(%arg0: i32, %arg1: i32) -> (i32, i32, i32) {
    %c1_i32 = arith.constant 1 : i32
    %0 = arith.addi %arg1, %c1_i32 : i32
    %c2_i32 = arith.constant 2 : i32
    %1 = arith.muli %0, %c2_i32 : i32
    %c1_i32_0 = arith.constant 1 : i32
    %2 = arith.minsi %1, %c1_i32_0 : i32
    %c0_i32 = arith.constant 0 : i32
    %c0_i32_1 = arith.constant 0 : i32
    return %arg0, %2, %c0_i32 : i32, i32, i32
  }
  func.func @transform_3(%arg0: i32, %arg1: i32) -> (i32, i32, i32, i32) {
    %c0_i32 = arith.constant 0 : i32
    %c0_i32_0 = arith.constant 0 : i32
    %c0_i32_1 = arith.constant 0 : i32
    return %arg0, %c0_i32, %arg1, %c0_i32_0 : i32, i32, i32, i32
  }
}

</mosaic_0001>

<llo_original>
// kernel: tpu_custom_call.1
$region0: #{tpu_custom_call.1}
  #allocation0 [shape = 'u32[]', space=smem, size = 0x4, offset = 0x4, fixed_abs, tag = 'smem constant byte address 0x4 - core index']
  #allocation1 [shape = 'u32[72,128]{1,0:T(1,128)}', space=vmem, size = 0x9000, scoped, tag = 'internal scratch']
  %s0 = inlined_call_operand.hbm [shape: f32[2,16,16], index: 0, kind: input, shape index: {}]
  %s1 = inlined_call_operand.hbm [shape: f32[2,16,16], index: 1, kind: input, shape index: {}]
  %s2 = inlined_call_operand.hbm [shape: f32[2,16,16], index: 2, kind: input, shape index: {}]
  %s3 = inlined_call_operand.hbm [shape: f32[2,2,16,16], index: 3, kind: output, shape index: {}]
  %s4 = sld [smem:[#allocation0]]
  $region57: #{tpu_custom_call.1} parent=0
    _
  %s6 = ssub.s32 1, %s4
  %s7 = scalar_select 0, %s6, %s4
  $region1: #{tpu_custom_call.1} parent=0
    #allocation2 [shape = 'u8[8192]{0}', space=vmem, size = 0x2000, scoped, tag = 'input window, operand 0']
    #allocation3 [shape = 's32[2]{0}', space=sflag, size = 0x8, scoped, tag = 'scoped memory for tpu_custom_call.1']
    #allocation4 [shape = 's32[2]{0}', space=sflag, size = 0x8, scoped, tag = 'scoped memory for tpu_custom_call.1']
    #allocation5 [shape = 'u8[16384]{0}', space=vmem, size = 0x4000, scoped, tag = 'input window, operand 1']
    #allocation6 [shape = 's32[2]{0}', space=sflag, size = 0x8, scoped, tag = 'scoped memory for tpu_custom_call.1']
    #allocation7 [shape = 'u8[8192]{0}', space=vmem, size = 0x2000, scoped, tag = 'input window, operand 2']
    #allocation8 [shape = 'u8[32768]{0}', space=vmem, size = 0x8000, scoped, tag = 'output window, operand 0']
    %8 = vsyncpa [#allocation3], 0
    %s9 = scalar_lea.sflag [#allocation3], 1
    %10 = vsyncpa %s9, 0
    %11 = vsyncpa [#allocation6], 0
    %s12 = scalar_lea.sflag [#allocation6], 1
    %13 = vsyncpa %s12, 0
    %14 = vsyncpa [#allocation4], 0
    %s15 = scalar_lea.sflag [#allocation4], 1
    %16 = vsyncpa %s15, 0
    loop: start=0, step=1, limit=4
    $region2: #{tpu_custom_call.1} parent=1 // loop_pre_header
      _
    $region3: #{tpu_custom_call.1} parent=1 // loop_header
      %s18 = sphi 0, %s22
      %p19 = scmp.ge.s32.totalorder %s18, 4
      %s25 = sphi 0, %s37
      %s26 = sphi 0, %s33
      %s27 = sphi 0, %s25
      %s28 = sphi 0, %s26
      %s29 = sphi 0, %s27
      %s30 = sphi 0, %s28
      %s50 = sphi 0, %s52
      %s53 = sphi 0, %s50
      %s54 = sphi 0, %s53
      %s70 = sphi 0, %s54
      %s78 = sphi 0, %s80
      %s81 = sphi 0, %s78
      %s82 = sphi 0, %s81
      %s98 = sphi 0, %s82
      %s114 = sphi 0, %s116
      %s117 = sphi 0, %s114
      %s118 = sphi 0, %s117
      %s134 = sphi 0, %s118
      %s142 = sphi 0, %s144
      %s145 = sphi 0, %s142
      %s146 = sphi 0, %s145
      %s162 = sphi 0, %s146
    $region4: #{tpu_custom_call.1} parent=1 // loop_header_branch
      %21 = sbr.rel (%p19) target = $region8
    $region5: #{tpu_custom_call.1} parent=1 // loop_body
      %s23 = ssub.s32 %s18, 1
      %s24 = ssub.s32 %s18, 2
      %s31 = sadd.s32 1, %s26
      %p32 = scmp.ge.s32.totalorder %s31, 1
      %s33 = scalar_select %p32, 0, %s31
      %s34 = sadd.s32 1, %s25
      %s35 = scalar_select %p32, %s34, %s25
      %p36 = scmp.ge.s32.totalorder %s35, 2
      %s37 = scalar_select %p36, 0, %s35
      %s38 = smul.u32 %s26, 2
      %s39 = ssub.s32 %s38, 1
      %p40 = scmp.gt.s32.totalorder %s39, 0
      %s41 = scalar_select %p40, %s39, 0
      %s42 = smul.u32 %s33, 2
      %s43 = ssub.s32 %s42, 1
      %p44 = scmp.gt.s32.totalorder %s43, 0
      %s45 = scalar_select %p44, %s43, 0
      %s46 = ssub.s32 %s25, %s37
      %s47 = ssub.s32 %s41, %s45
      %s48 = sor.u32 %s46, %s47
      %p49 = scmp.eq.s32.totalorder %s48, 0
      %s51 = sadd.s32 %s50, 1
      %s52 = scalar_select %p49, %s50, %s51
      %p55 = pneg %p49
      %p56 = scmp.eq.s32.totalorder %s18, 1
      %p57 = por %p55, %p56
      %p58 = scmp.ne.s32.totalorder %s50, %s53
      %p59 = scmp.eq.s32.totalorder %s18, 0
      %p60 = por %p58, %p59
      %p61 = scmp.ne.s32.totalorder %s50, %s53
      %p62 = scmp.eq.s32.totalorder %s23, 1
      %p63 = por %p61, %p62
      %p64 = scmp.ne.s32.totalorder %s53, %s54
      %p65 = scmp.eq.s32.totalorder %s23, 0
      %p66 = por %p64, %p65
      %p67 = scmp.ne.s32.totalorder %s53, %s54
      %p68 = scmp.eq.s32.totalorder %s24, 1
      %p69 = por %p67, %p68
      %p71 = scmp.ne.s32.totalorder %s54, %s70
      %p72 = scmp.eq.s32.totalorder %s24, 0
      %p73 = por %p71, %p72
      %s74 = ssub.s32 %s25, %s37
      %s75 = ssub.s32 %s26, %s33
      %s76 = sor.u32 %s74, %s75
      %p77 = scmp.eq.s32.totalorder %s76, 0
      %s79 = sadd.s32 %s78, 1
      %s80 = scalar_select %p77, %s78, %s79
      %p83 = pneg %p77
      %p84 = scmp.eq.s32.totalorder %s18, 1
      %p85 = por %p83, %p84
      %p86 = scmp.ne.s32.totalorder %s78, %s81
      %p87 = scmp.eq.s32.totalorder %s18, 0
      %p88 = por %p86, %p87
      %p89 = scmp.ne.s32.totalorder %s78, %s81
      %p90 = scmp.eq.s32.totalorder %s23, 1
      %p91 = por %p89, %p90
      %p92 = scmp.ne.s32.totalorder %s81, %s82
      %p93 = scmp.eq.s32.totalorder %s23, 0
      %p94 = por %p92, %p93
      %p95 = scmp.ne.s32.totalorder %s81, %s82
      %p96 = scmp.eq.s32.totalorder %s24, 1
      %p97 = por %p95, %p96
      %p99 = scmp.ne.s32.totalorder %s82, %s98
      %p100 = scmp.eq.s32.totalorder %s24, 0
      %p101 = por %p99, %p100
      %s102 = sadd.s32 %s26, 1
      %s103 = smul.u32 %s102, 2
      %p104 = scmp.lt.s32.totalorder %s103, 1
      %s105 = scalar_select %p104, %s103, 1
      %s106 = sadd.s32 %s33, 1
      %s107 = smul.u32 %s106, 2
      %p108 = scmp.lt.s32.totalorder %s107, 1
      %s109 = scalar_select %p108, %s107, 1
      %s110 = ssub.s32 %s25, %s37
      %s111 = ssub.s32 %s105, %s109
      %s112 = sor.u32 %s110, %s111
      %p113 = scmp.eq.s32.totalorder %s112, 0
      %s115 = sadd.s32 %s114, 1
      %s116 = scalar_select %p113, %s114, %s115
      %p119 = pneg %p113
      %p120 = scmp.eq.s32.totalorder %s18, 1
      %p121 = por %p119, %p120
      %p122 = scmp.ne.s32.totalorder %s114, %s117
      %p123 = scmp.eq.s32.totalorder %s18, 0
      %p124 = por %p122, %p123
      %p125 = scmp.ne.s32.totalorder %s114, %s117
      %p126 = scmp.eq.s32.totalorder %s23, 1
      %p127 = por %p125, %p126
      %p128 = scmp.ne.s32.totalorder %s117, %s118
      %p129 = scmp.eq.s32.totalorder %s23, 0
      %p130 = por %p128, %p129
      %p131 = scmp.ne.s32.totalorder %s117, %s118
      %p132 = scmp.eq.s32.totalorder %s24, 1
      %p133 = por %p131, %p132
      %p135 = scmp.ne.s32.totalorder %s118, %s134
      %p136 = scmp.eq.s32.totalorder %s24, 0
      %p137 = por %p135, %p136
      %s138 = ssub.s32 %s25, %s37
      %s139 = ssub.s32 %s26, %s33
      %s140 = sor.u32 %s138, %s139
      %p141 = scmp.eq.s32.totalorder %s140, 0
      %s143 = sadd.s32 %s142, 1
      %s144 = scalar_select %p141, %s142, %s143
      %p147 = pneg %p141
      %p148 = scmp.eq.s32.totalorder %s18, 1
      %p149 = por %p147, %p148
      %p150 = scmp.ne.s32.totalorder %s142, %s145
      %p151 = scmp.eq.s32.totalorder %s18, 0
      %p152 = por %p150, %p151
      %p153 = scmp.ne.s32.totalorder %s142, %s145
      %p154 = scmp.eq.s32.totalorder %s23, 1
      %p155 = por %p153, %p154
      %p156 = scmp.ne.s32.totalorder %s145, %s146
      %p157 = scmp.eq.s32.totalorder %s23, 0
      %p158 = por %p156, %p157
      %p159 = scmp.ne.s32.totalorder %s145, %s146
      %p160 = scmp.eq.s32.totalorder %s24, 1
      %p161 = por %p159, %p160
      %p163 = scmp.ne.s32.totalorder %s146, %s162
      %p164 = scmp.eq.s32.totalorder %s24, 0
      %p165 = por %p163, %p164
      %p166 = scmp.le.s32.totalorder 1, %s18
      %p167 = scmp.lt.s32.totalorder %s18, 3
      %p168 = pnand %p166, %p167
      %p169 = pneg %p168
      // Predicated region
      $region9: #{tpu_custom_call.1} parent=5 // pred_check
        _
      $region10: #{tpu_custom_call.1} parent=5 // pred_check_branch
        %171 = sbr.rel (%p168) target = $region12
      $region11: #{tpu_custom_call.1} parent=5 // pred_region
        %s172 = ssub.s32 %s18, 1
      $region12: #{tpu_custom_call.1} parent=5 // pred_fallthru
        _
      %p173 = scmp.lt.s32.totalorder %s18, 2
      // Predicated region
      $region13: #{tpu_custom_call.1} parent=5 // pred_check
        %p174 = pneg %p173
      $region14: #{tpu_custom_call.1} parent=5 // pred_check_branch
        %176 = sbr.rel (%p174) target = $region16
      $region15: #{tpu_custom_call.1} parent=5 // pred_region
        // Predicated region
        $region17: #{tpu_custom_call.1} parent=15 // pred_check
          %p177 = pneg %p60
        $region18: #{tpu_custom_call.1} parent=15 // pred_check_branch
          %179 = sbr.rel (%p177) target = $region20
        $region19: #{tpu_custom_call.1} parent=15 // pred_region
          %s180 = sand.u32 %s50, 1
          %s181 = scalar_lea.sflag [#allocation3], %s180
          %s182 = sand.u32 %s50, 1
          %s183 = smul.addr %s182, 8
          %s184 = scalar_lea.vmem [#allocation2], %s183
          %s185 = smul.u32 %s26, 2
          %s186 = ssub.s32 %s185, 1
          %p187 = scmp.gt.s32.totalorder %s186, 0
          %s188 = scalar_select %p187, %s186, 0
          %190 = vsyncadd %s181, 0
          %s191 = smul.addr %s25, 2
          %s192 = sadd.s32 %s188, %s191
          %s193 = smul.addr %s192, 8
          %s194 = scalar_lea.hbm %s0, %s193
          %s196 = sshll.u32 %s194, 4
          %s197 = int_to_ptr.hbm [resolvable:$true] %s196
          %s198 = sshll.u32 %s184, 4
          %s199 = int_to_ptr.vmem [resolvable:$true] %s198
          %201 = dma.hbm_to_vmem [thread:$0]  %s197, 128, %s199, %s181
        $region20: #{tpu_custom_call.1} parent=15 // pred_fallthru
          _
        // Predicated region
        $region21: #{tpu_custom_call.1} parent=15 // pred_check
          %p202 = pneg %p88
        $region22: #{tpu_custom_call.1} parent=15 // pred_check_branch
          %204 = sbr.rel (%p202) target = $region24
        $region23: #{tpu_custom_call.1} parent=15 // pred_region
          %s205 = sand.u32 %s18, 1
          %s206 = scalar_lea.sflag [#allocation6], %s205
          %s207 = sand.u32 %s78, 1
          %s208 = smul.addr %s207, 16
          %s209 = scalar_lea.vmem [#allocation5], %s208
          %s210 = smul.u32 2, %s26
          %212 = vsyncadd %s206, 0
          %s213 = smul.addr %s25, 2
          %s214 = sadd.s32 %s210, %s213
          %s215 = smul.addr %s214, 8
          %s216 = scalar_lea.hbm %s1, %s215
          %s217 = sshll.u32 %s216, 4
          %s218 = int_to_ptr.hbm [resolvable:$true] %s217
          %s219 = sshll.u32 %s209, 4
          %s220 = int_to_ptr.vmem [resolvable:$true] %s219
          %225 = dma.hbm_to_vmem [thread:$0]  %s218, 256, %s220, %s206, 128, 128, 8
        $region24: #{tpu_custom_call.1} parent=15 // pred_fallthru
          _
        // Predicated region
        $region25: #{tpu_custom_call.1} parent=15 // pred_check
          %p226 = pneg %p124
        $region26: #{tpu_custom_call.1} parent=15 // pred_check_branch
          %228 = sbr.rel (%p226) target = $region28
        $region27: #{tpu_custom_call.1} parent=15 // pred_region
          %s229 = sand.u32 %s18, 1
          %s230 = scalar_lea.sflag [#allocation6], %s229
          %s231 = sand.u32 %s114, 1
          %s232 = smul.addr %s231, 8
          %s233 = scalar_lea.vmem [#allocation7], %s232
          %s234 = sadd.s32 %s26, 1
          %s235 = smul.u32 %s234, 2
          %p236 = scmp.lt.s32.totalorder %s235, 1
          %s237 = scalar_select %p236, %s235, 1
          %239 = vsyncadd %s230, 0
          %s240 = smul.addr %s25, 2
          %s241 = sadd.s32 %s237, %s240
          %s242 = smul.addr %s241, 8
          %s243 = scalar_lea.hbm %s2, %s242
          %s245 = sshll.u32 %s243, 4
          %s246 = int_to_ptr.hbm [resolvable:$true] %s245
          %s247 = sshll.u32 %s233, 4
          %s248 = int_to_ptr.vmem [resolvable:$true] %s247
          %250 = dma.hbm_to_vmem [thread:$0]  %s246, 128, %s248, %s230
        $region28: #{tpu_custom_call.1} parent=15 // pred_fallthru
          _
      $region16: #{tpu_custom_call.1} parent=5 // pred_fallthru
        _
      %p251 = scmp.le.s32.totalorder 1, %s18
      %p252 = scmp.lt.s32.totalorder %s18, 3
      %p253 = pnand %p251, %p252
      %p254 = pneg %p253
      // Predicated region
      $region29: #{tpu_custom_call.1} parent=5 // pred_check
        _
      $region30: #{tpu_custom_call.1} parent=5 // pred_check_branch
        %256 = sbr.rel (%p253) target = $region32
      $region31: #{tpu_custom_call.1} parent=5 // pred_region
        %s257 = ssub.s32 %s18, 1
        %s258 = sand.u32 %s53, 1
        %s259 = scalar_lea.sflag [#allocation3], %s258
        %s260 = sand.u32 %s53, 1
        %s261 = smul.addr %s260, 8
        %s262 = scalar_lea.vmem [#allocation2], %s261
        // Predicated region
        $region33: #{tpu_custom_call.1} parent=31 // pred_check
          %p263 = pneg %p66
        $region34: #{tpu_custom_call.1} parent=31 // pred_check_branch
          %265 = sbr.rel (%p263) target = $region36
        $region35: #{tpu_custom_call.1} parent=31 // pred_region
          %267 = dma.done %s259, 128
        $region36: #{tpu_custom_call.1} parent=31 // pred_fallthru
          _
        %s268 = sand.u32 %s23, 1
        %s269 = scalar_lea.sflag [#allocation6], %s268
        %s270 = sand.u32 %s81, 1
        %s271 = smul.addr %s270, 16
        %s272 = scalar_lea.vmem [#allocation5], %s271
        // Predicated region
        $region37: #{tpu_custom_call.1} parent=31 // pred_check
          %p273 = pneg %p94
        $region38: #{tpu_custom_call.1} parent=31 // pred_check_branch
          %275 = sbr.rel (%p273) target = $region40
        $region39: #{tpu_custom_call.1} parent=31 // pred_region
          %277 = dma.done %s269, 256
        $region40: #{tpu_custom_call.1} parent=31 // pred_fallthru
          _
        %s278 = sand.u32 %s23, 1
        %s279 = scalar_lea.sflag [#allocation6], %s278
        %s280 = sand.u32 %s117, 1
        %s281 = smul.addr %s280, 8
        %s282 = scalar_lea.vmem [#allocation7], %s281
        // Predicated region
        $region41: #{tpu_custom_call.1} parent=31 // pred_check
          %p283 = pneg %p130
        $region42: #{tpu_custom_call.1} parent=31 // pred_check_branch
          %285 = sbr.rel (%p283) target = $region44
        $region43: #{tpu_custom_call.1} parent=31 // pred_region
          %287 = dma.done %s279, 128
        $region44: #{tpu_custom_call.1} parent=31 // pred_fallthru
          _
        %s288 = sand.u32 %s53, 1
        %s289 = scalar_lea.sflag [#allocation3], %s288
        %s290 = sand.u32 %s53, 1
        %s291 = smul.addr %s290, 8
        %s292 = scalar_lea.vmem [#allocation2], %s291
        %p293 = pneg %p66
        %p294 = pneg %p63
        %s295 = sand.u32 %s23, 1
        %s296 = scalar_lea.sflag [#allocation6], %s295
        %s297 = sand.u32 %s81, 1
        %s298 = smul.addr %s297, 16
        %s299 = scalar_lea.vmem [#allocation5], %s298
        %p300 = pneg %p94
        %p301 = pneg %p91
        %s302 = sand.u32 %s23, 1
        %s303 = scalar_lea.sflag [#allocation6], %s302
        %s304 = sand.u32 %s117, 1
        %s305 = smul.addr %s304, 8
        %s306 = scalar_lea.vmem [#allocation7], %s305
        %p307 = pneg %p130
        %p308 = pneg %p127
        %p309 = pneg %p158
        %p310 = pneg %p155
        %s311 = sand.u32 %s145, 1
        %s312 = scalar_lea.sflag [#allocation4], %s311
        %s313 = sand.u32 %s145, 1
        %s314 = smul.addr %s313, 32
        %s315 = scalar_lea.vmem [#allocation8], %s314
        %s316 = smul.u32 %s28, 2
        %s317 = ssub.s32 %s316, 1
        %p318 = scmp.gt.s32.totalorder %s317, 0
        %s319 = scalar_select %p318, %s317, 0
        %s320 = smul.u32 2, %s28
        %s321 = sadd.s32 %s28, 1
        %s322 = smul.u32 %s321, 2
        %p323 = scmp.lt.s32.totalorder %s322, 1
        %s324 = scalar_select %p323, %s322, 1
        %s325 = smul.u32 2, %s28
        %v326 = vld [vmem:[%s272] sm:$0xff]
        %v327 = vld [vmem:[%s272 + $0x8] sm:$0xff]
        %p328 = scmp.eq.s32.totalorder %s28, 0
        %v329 = vld [vmem:[%s262 + $0x7] sm:$0x1]
        %s330 = scalar_select %p328, 1, 0
        %v331 = vstv %s330
        %vm332 = vcmp.eq.s32.totalorder %v331, 1
        %v334 = vrot.slane %v329, 7
        %v336 = vsel %vm332, %v326, %v334
        %v337 = vld [vmem:[%s282] sm:$0x1]
        %v339 = vrot.slane %v337, 2
        %v341 = vsel %vm332, %v327, %v339
        %v343 = vrot.slane %v336, 1
        %vm347 = vcmask 1040384
        %v348 = vrot.slane %v326, 7
        %v349 = vrot.slane %v327, 7
        %v350 = vsel %vm347, %v348, %v349
        %v355 = vrot.slane %v341, 5
        %v357 = vsel %vm347, %v343, %v348
        %v358 = vsel %vm347, %v349, %v355
        %361 = vrot.lane.b32.xlu0 %v357, 127
        %v362 = vpop.permute.xlu0 %361
        %363 = vrot.lane.b32.xlu0 %v350, 127
        %v364 = vpop.permute.xlu0 %363
        %365 = vrot.lane.b32.xlu0 %v358, 127
        %v366 = vpop.permute.xlu0 %365
        %370 = vrot.lane.b32.xlu0 %v357, 1
        %v371 = vpop.permute.xlu0 %370
        %372 = vrot.lane.b32.xlu0 %v350, 1
        %v373 = vpop.permute.xlu0 %372
        %374 = vrot.lane.b32.xlu0 %v358, 1
        %v375 = vpop.permute.xlu0 %374
        %vm379 = vcmask 7168
        %v380 = vsel %vm379, %v362, %v371
        %v381 = vsel %vm379, %v364, %v373
        %v382 = vsel %vm379, %v366, %v375
        %vm383 = vcmask 121856
        %v384 = vsel %vm383, %v362, %v371
        %v385 = vsel %vm383, %v364, %v373
        %v386 = vsel %vm383, %v366, %v375
        %v387 = vsub.f32 %v384, %v380
        %v388 = vsub.f32 %v385, %v381
        %v389 = vsub.f32 %v386, %v382
        %v390 = vmul.f32 %v357, 2.0
        %v391 = vmul.f32 %v350, 2.0
        %v392 = vmul.f32 %v358, 2.0
        %v393 = vadd.f32 %v380, %v390
        %v394 = vadd.f32 %v381, %v391
        %v395 = vadd.f32 %v382, %v392
        %v396 = vadd.f32 %v393, %v384
        %v397 = vadd.f32 %v394, %v385
        %v398 = vadd.f32 %v395, %v386
        %v399 = vmul.f32 %v387, 2.0
        %v400 = vmul.f32 %v388, 2.0
        %v401 = vmul.f32 %v389, 2.0
        %vm405 = vcmask 1046528
        %v406 = vrot.slane %v399, 1
        %v407 = vrot.slane %v400, 1
        %v408 = vsel %vm405, %v406, %v407
        %v409 = vrot.slane %v401, 1
        %v410 = vsel %vm405, %v407, %v409
        %v413 = vadd.f32 %v387, %v408
        %v414 = vadd.f32 %v388, %v410
        %vm418 = vcmask 1045504
        %v419 = vrot.slane %v387, 2
        %v420 = vrot.slane %v388, 2
        %v421 = vsel %vm418, %v419, %v420
        %v422 = vrot.slane %v389, 2
        %v423 = vsel %vm418, %v420, %v422
        %v426 = vadd.f32 %v413, %v421
        %v427 = vadd.f32 %v414, %v423
        %vm430 = vcmask 1041408
        %v431 = vrot.slane %v396, 6
        %v432 = vrot.slane %v397, 6
        %v433 = vsel %vm430, %v431, %v432
        %v437 = vsub.f32 %v396, %v431
        %v438 = vsub.f32 %v397, %v433
        %v439 = vsub.f32 %v398, %v432
        %vm440 = vcmask 130048
        %441 = vst.msk [vmem:[%s315] sm:$0xff] %vm440, %v426
        %442 = vst.msk [vmem:[%s315 + $0x8] sm:$0xff] %vm440, %v427
        %s443 = scalar_lea.vmem %s315, 16 [#allocation8]
        %vm444 = vcmask 130050
        %445 = vst.msk [vmem:[%s443 - $0x2] sm:$0xfc] %vm444, %v437
        %446 = vst.msk [vmem:[%s443 + $0x6] sm:$0xff] %vm440, %v438
        %vm447 = vcmask 123904
        %448 = vst.msk [vmem:[%s443 + $0xe] sm:$0x3] %vm447, %v439
        %s449 = sand.u32 %s145, 1
        %s450 = scalar_lea.sflag [#allocation4], %s449
        %s451 = sand.u32 %s145, 1
        %s452 = smul.addr %s451, 32
        %s453 = scalar_lea.vmem [#allocation8], %s452
        // Predicated region
        $region45: #{tpu_custom_call.1} parent=31 // pred_check
          %p454 = pneg %p155
        $region46: #{tpu_custom_call.1} parent=31 // pred_check_branch
          %456 = sbr.rel (%p454) target = $region48
        $region47: #{tpu_custom_call.1} parent=31 // pred_region
          %s457 = smul.u32 2, %s28
          %459 = vsyncadd %s450, 0
          %s460 = smul.addr %s27, 4
          %s461 = sadd.s32 %s457, %s460
          %s462 = smul.addr %s461, 8
          %s463 = scalar_lea.hbm %s3, %s462
          %s464 = sshll.u32 %s453, 4
          %s465 = int_to_ptr.vmem [resolvable:$true] %s464
          %s466 = sshll.u32 %s463, 4
          %s467 = int_to_ptr.hbm [resolvable:$true] %s466
          %472 = dma.vmem_to_hbm [thread:$0]  %s465, 512, %s467, %s450, 128, 128, 8
        $region48: #{tpu_custom_call.1} parent=31 // pred_fallthru
          _
      $region32: #{tpu_custom_call.1} parent=5 // pred_fallthru
        _
      %p473 = scmp.le.s32.totalorder 2, %s18
      // Predicated region
      $region49: #{tpu_custom_call.1} parent=5 // pred_check
        %p474 = pneg %p473
      $region50: #{tpu_custom_call.1} parent=5 // pred_check_branch
        %476 = sbr.rel (%p474) target = $region52
      $region51: #{tpu_custom_call.1} parent=5 // pred_region
        %s477 = ssub.s32 %s18, 2
        // Predicated region
        $region53: #{tpu_custom_call.1} parent=51 // pred_check
          %p478 = pneg %p161
        $region54: #{tpu_custom_call.1} parent=51 // pred_check_branch
          %480 = sbr.rel (%p478) target = $region56
        $region55: #{tpu_custom_call.1} parent=51 // pred_region
          %s481 = sand.u32 %s146, 1
          %s482 = scalar_lea.sflag [#allocation4], %s481
          %s483 = sand.u32 %s146, 1
          %s484 = smul.addr %s483, 32
          %s485 = scalar_lea.vmem [#allocation8], %s484
          %487 = dma.done %s482, 512
        $region56: #{tpu_custom_call.1} parent=51 // pred_fallthru
          _
      $region52: #{tpu_custom_call.1} parent=5 // pred_fallthru
        _
    $region6: #{tpu_custom_call.1} parent=1 // loop_footer
      %s22 = sadd.s32 1, %s18
    $region7: #{tpu_custom_call.1} parent=1 // loop_footer_branch
      %17 = sbr.rel target = $region3
    $region8: #{tpu_custom_call.1} parent=1 // loop_exit
      _
    %488 = vsyncpa [#allocation3], 1
    %s489 = scalar_lea.sflag [#allocation3], 1
    %490 = vsyncpa %s489, 1
    %491 = vsyncpa [#allocation6], 1
    %s492 = scalar_lea.sflag [#allocation6], 1
    %493 = vsyncpa %s492, 1
    %494 = vsyncpa [#allocation4], 1
    %s495 = scalar_lea.sflag [#allocation4], 1
    %496 = vsyncpa %s495, 1

</llo_original>
